<compile_context>
chip_gen: v5e
topology: v5e:2x2
jax: 0.10.0
libtpu: 0.0.40
codegen_flags: <defaults>
</compile_context>

<pallas_src>
import functools

import jax
import jax.numpy as jnp
from jax.experimental import pallas as pl
from jax.experimental.pallas import tpu as pltpu

_LANE = 128


def _round_up(x, m):
    return (x + m - 1) // m * m


def _sublane_multiple(dtype):
    # vreg sublane packing: f32 -> 8 rows, bf16 -> 16, int8/fp8 -> 32.
    return {4: 8, 2: 16, 1: 32}.get(jnp.dtype(dtype).itemsize, 8)


def _vmem_capacity_bytes():
    """Physical VMEM per TensorCore; conservative 64 MiB (v7x) fallback."""
    try:
        info = pltpu.get_tpu_info()
        for attr in ("vmem_capacity_bytes", "vmem_bytes"):
            cap = getattr(info, attr, None)
            if cap:
                return int(cap)
    except Exception:
        pass
    return 64 << 20


def _mixture_kernel(x_ref, w_ref, b_ref, out_ref, acc_ref, *, K, temperature,
                    band_offs):
    k = pl.program_id(1)

    @pl.when(k == 0)
    def _():
        acc_ref[...] = jnp.zeros_like(acc_ref)

    # MXU matmul, f32 accumulation across the (possibly tiled) contraction axis.
    acc_ref[...] += jnp.dot(x_ref[...], w_ref[...],
                            preferred_element_type=jnp.float32)

    @pl.when(k == pl.num_programs(1) - 1)
    def _():
        if band_offs is None:
            # 5K <= 128: the whole parameter row lives in one vreg.  Compute
            # every activation on the full tile and select per lane band.
            params = acc_ref[...] + b_ref[...]
            lane = jax.lax.broadcasted_iota(jnp.int32, params.shape, 1)
            is_loc = lane < 2 * K
            is_scale = (lane >= 2 * K) & (lane < 4 * K)
            is_weight = (lane >= 4 * K) & (lane < 5 * K)  # excludes pad lanes

            locs = jnp.tanh(params)
            log_scales = jnp.clip(params, -5.0, 3.0)
            if temperature is not None:
                log_scales = jnp.float32(temperature) * log_scales
            scales = jnp.exp(log_scales)

            logits = jnp.where(is_weight, params, -jnp.inf)
            m = jnp.max(logits, axis=-1, keepdims=True)
            lse = m + jnp.log(jnp.sum(jnp.exp(logits - m), axis=-1,
                                      keepdims=True))
            logw = params - lse

            fused = jnp.where(is_loc, locs, jnp.where(is_scale, scales, logw))
            out_ref[...] = fused.astype(out_ref.dtype)
        else:
            # 5K > 128: columns were laid out as 128-aligned bands by the
            # wrapper, so each transcendental runs only on its own band and
            # every store is lane-dense and unmasked.
            o_loc, o_scale, o_wgt, _ = band_offs

            loc_p = acc_ref[:, o_loc:o_scale] + b_ref[:, o_loc:o_scale]
            out_ref[:, o_loc:o_scale] = jnp.tanh(loc_p).astype(out_ref.dtype)

            sc_p = acc_ref[:, o_scale:o_wgt] + b_ref[:, o_scale:o_wgt]
            log_scales = jnp.clip(sc_p, -5.0, 3.0)
            if temperature is not None:
                log_scales = jnp.float32(temperature) * log_scales
            out_ref[:, o_scale:o_wgt] = jnp.exp(log_scales).astype(out_ref.dtype)

            wgt_p = acc_ref[:, o_wgt:] + b_ref[:, o_wgt:]
            lane = jax.lax.broadcasted_iota(jnp.int32, wgt_p.shape, 1)
            logits = jnp.where(lane < K, wgt_p, -jnp.inf)
            m = jnp.max(logits, axis=-1, keepdims=True)
            lse = m + jnp.log(jnp.sum(jnp.exp(logits - m), axis=-1,
                                      keepdims=True))
            out_ref[:, o_wgt:] = (wgt_p - lse).astype(out_ref.dtype)


def mixture_same_family_forward(context, weight, bias, marks_dist_components,
                                temperature=None, *, out_dtype=None, tk=None):
    """Returns (log_weights, locs, scales) parameterizing the mixture.

    context: (B, S, in_features)
    weight : (in_features, 5*K)   -- transposed PyTorch Linear weight
    bias   : (5*K,)
    """
    K = int(marks_dist_components)
    five_k = 5 * K
    B, S, F = context.shape
    M = B * S
    out_dtype = (jnp.dtype(out_dtype) if out_dtype is not None
                 else jnp.dtype(context.dtype))

    x2d = context.reshape(M, F)

    # ---- lane-dense column layout ------------------------------------------
    banded = five_k > _LANE
    if not banded:
        n_pad = _LANE
        w_p = jnp.pad(weight, ((0, 0), (0, n_pad - five_k)))
        b_p = jnp.pad(bias, (0, n_pad - five_k))
        band_offs = None
    else:
        L_loc = _round_up(2 * K, _LANE)
        L_scale = _round_up(2 * K, _LANE)
        L_wgt = _round_up(K, _LANE)
        n_pad = L_loc + L_scale + L_wgt

        def _band(a, lo, hi, width):
            seg = a[..., lo:hi]
            pad = [(0, 0)] * (a.ndim - 1) + [(0, width - (hi - lo))]
            return jnp.pad(seg, pad)

        w_p = jnp.concatenate([_band(weight, 0, 2 * K, L_loc),
                               _band(weight, 2 * K, 4 * K, L_scale),
                               _band(weight, 4 * K, five_k, L_wgt)], axis=-1)
        b_p = jnp.concatenate([_band(bias, 0, 2 * K, L_loc),
                               _band(bias, 2 * K, 4 * K, L_scale),
                               _band(bias, 4 * K, five_k, L_wgt)], axis=-1)
        band_offs = (0, L_loc, L_loc + L_scale, n_pad)
    b2d = b_p.reshape(1, n_pad).astype(jnp.float32)

    # ---- generation-aware VMEM budget ----------------------------------------
    x_it = jnp.dtype(x2d.dtype).itemsize
    w_it = jnp.dtype(w_p.dtype).itemsize
    o_it = out_dtype.itemsize
    sub = max(_sublane_multiple(x2d.dtype), _sublane_multiple(out_dtype), 8)
    w_sub = _sublane_multiple(w_p.dtype)

    vmem_cap = _vmem_capacity_bytes()
    budget = vmem_cap // 2        # ~32 MiB on v7x (64 MiB/TC), ~64 MiB on v5e/v6e

    # ---- contraction-axis tiling (keeps TM large when F * n_pad is big) ------
    if tk is not None:
        TK = min(int(tk), F)
    else:
        TK = F
        while TK > _LANE and 2 * _round_up(TK, w_sub) * n_pad * w_it > budget // 2:
            TK = max(_LANE, _round_up(TK // 2, _LANE))
    if TK < F:
        TK = max(_LANE, _round_up(TK, _LANE))
    if TK >= F:
        TK, F_pad, num_k = F, F, 1
    else:
        F_pad = _round_up(F, TK)
        num_k = F_pad // TK

    # ---- row-tile size from *physical* (lane/sublane padded) footprints ------
    x_lanes = _round_up(TK, _LANE)
    per_row = (2 * x_lanes * x_it          # double-buffered x tile
               + 2 * n_pad * o_it          # double-buffered out tile
               + n_pad * 4                 # f32 accumulator scratch
               + 6 * n_pad * 4)            # live f32 temporaries in finalize
    fixed = (2 * _round_up(TK, w_sub) * n_pad * w_it   # weight tile (dbl-buffered)
             + 2 * 8 * n_pad * 4)                      # bias tile
    tm_cap = max(sub, ((budget - fixed) // per_row) // sub * sub)

    MIN_GRID_STEPS = 4           # keep both v7x TensorCores + the DMA pipeline busy
    m_ceil = _round_up(M, sub)
    tm_for_steps = _round_up(pl.cdiv(M, MIN_GRID_STEPS), sub)
    TM = int(max(sub, min(tm_cap, tm_for_steps, m_ceil, 2048)))

    # ---- tiny row pad only when M isn't a sublane multiple (<= sub-1 rows).
    #      Otherwise the grid uses cdiv + Pallas partial-block masking, so no
    #      full copy of x is made when M % TM != 0.
    M_sub = m_ceil
    pad_rows = M_sub - M
    pad_f = F_pad - F
    if pad_rows or pad_f:
        x2d = jnp.pad(x2d, ((0, pad_rows), (0, pad_f)))
    if pad_f:
        w_p = jnp.pad(w_p, ((0, pad_f), (0, 0)))

    num_m = pl.cdiv(M_sub, TM)

    vmem_limit = int(min(vmem_cap * 5 // 8,
                         max(32 << 20, fixed + TM * per_row + (8 << 20))))

    kernel = functools.partial(_mixture_kernel, K=K, temperature=temperature,
                               band_offs=band_offs)

    out = pl.pallas_call(
        kernel,
        out_shape=jax.ShapeDtypeStruct((M_sub, n_pad), out_dtype),
        grid=(num_m, num_k),
        in_specs=[
            pl.BlockSpec((TM, TK), lambda i, k: (i, k)),       # x tile
            pl.BlockSpec((TK, n_pad), lambda i, k: (k, 0)),    # weight tile
            pl.BlockSpec((1, n_pad), lambda i, k: (0, 0)),     # bias (resident)
        ],
        out_specs=pl.BlockSpec((TM, n_pad), lambda i, k: (i, 0)),
        scratch_shapes=[pltpu.VMEM((TM, n_pad), jnp.float32)],
        compiler_params=pltpu.CompilerParams(
            dimension_semantics=("parallel", "arbitrary"),
            vmem_limit_bytes=vmem_limit,
        ),
    )(x2d, w_p, b2d)

    out = out[:M]
    if band_offs is None:
        locs = out[:, : 2 * K]
        scales = out[:, 2 * K: 4 * K]
        log_weights = out[:, 4 * K: five_k]
    else:
        o_loc, o_scale, o_wgt, _ = band_offs
        locs = out[:, o_loc: o_loc + 2 * K]
        scales = out[:, o_scale: o_scale + 2 * K]
        log_weights = out[:, o_wgt: o_wgt + K]
    # Same row-major reshape semantics as the PyTorch code.
    locs = locs.reshape(B, S, K, 2)
    scales = scales.reshape(B, S, K, 2)
    log_weights = log_weights.reshape(B, S, K)
    return log_weights, locs, scales


def _reference_forward(context, weight, bias, K, temperature=None):
    """Pure-JAX reference mirroring the PyTorch forward."""
    params = (context.astype(jnp.float32) @ weight.astype(jnp.float32)
              + bias.astype(jnp.float32))
    B, S = context.shape[0], context.shape[1]
    locs = jnp.tanh(params[..., : 2 * K]).reshape(B, S, K, 2)
    log_scales = jnp.clip(params[..., 2 * K: 4 * K], -5.0, 3.0).reshape(B, S, K, 2)
    log_weights = jax.nn.log_softmax(params[..., 4 * K:], axis=-1)
    if temperature is not None:
        log_scales = temperature * log_scales
    return log_weights, locs, jnp.exp(log_scales)


def _check(name, got, ref, atol, rtol):
    for g, r in zip(got, ref):
        assert g.shape == r.shape, (name, g.shape, r.shape)
        assert jnp.allclose(g.astype(jnp.float32), r, atol=atol, rtol=rtol), name


if __name__ == "__main__":
    def make(key, B, S, F, K, dtype):
        k1, k2, k3 = jax.random.split(key, 3)
        bound = 1.0 / (F ** 0.5)
        ctx = jax.random.normal(k1, (B, S, F), jnp.float32).astype(dtype)
        w = jax.random.uniform(k2, (F, 5 * K), jnp.float32, -bound, bound).astype(dtype)
        b = jax.random.uniform(k3, (5 * K,), jnp.float32, -bound, bound).astype(dtype)
        return ctx, w, b

    # 1) base f32 case (fused 128-lane slab, single contraction step)
    B, S, F, K = 2, 8, 32, 4
    ctx, w, b = make(jax.random.PRNGKey(0), B, S, F, K, jnp.float32)
    out = jax.block_until_ready(mixture_same_family_forward(ctx, w, b, K))
    _check("base", out, _reference_forward(ctx, w, b, K), 1e-5, 1e-5)

    # 2) temperature path
    out = jax.block_until_ready(
        mixture_same_family_forward(ctx, w, b, K, temperature=0.5))
    _check("temperature", out, _reference_forward(ctx, w, b, K, temperature=0.5),
           1e-5, 1e-5)

    # 3) contraction-axis tiling: F split into TK=128 chunks (accumulator path)
    ctx3, w3, b3 = make(jax.random.PRNGKey(1), 2, 8, 256, 4, jnp.float32)
    out = jax.block_until_ready(mixture_same_family_forward(ctx3, w3, b3, 4, tk=128))
    _check("k_tiled", out, _reference_forward(ctx3, w3, b3, 4), 1e-4, 1e-4)

    # 4) banded layout (5K > 128): per-band 128-aligned activations & stores
    ctx4, w4, b4 = make(jax.random.PRNGKey(2), 2, 8, 64, 32, jnp.float32)
    out = jax.block_until_ready(mixture_same_family_forward(ctx4, w4, b4, 32))
    _check("banded", out, _reference_forward(ctx4, w4, b4, 32), 1e-4, 1e-4)

    # 5) bf16 activations + ragged M (partial last block, bf16 output)
    ctx5, w5, b5 = make(jax.random.PRNGKey(3), 3, 5, 32, 4, jnp.bfloat16)
    out = jax.block_until_ready(mixture_same_family_forward(ctx5, w5, b5, 4))
    _check("bf16_ragged", out, _reference_forward(ctx5, w5, b5, 4), 5e-2, 5e-2)

    print("KERNEL_OK")
</pallas_src>

<mosaic_0001>
module attributes {stable_mosaic.version = 11 : i64} {
  func.func @_mixture_kernel(%arg0: i32, %arg1: i32, %arg2: memref<8x32xf32, #tpu.memory_space<vmem>>, %arg3: memref<32x128xf32, #tpu.memory_space<vmem>>, %arg4: memref<1x128xf32, #tpu.memory_space<vmem>>, %arg5: memref<8x128xf32, #tpu.memory_space<vmem>>, %arg6: memref<8x128xf32, #tpu.memory_space<vmem>>) attributes {dimension_semantics = [#tpu.dimension_semantics<parallel>, #tpu.dimension_semantics<arbitrary>], iteration_bounds = array<i64: 2, 1>, scalar_prefetch = 0 : i64, scratch_operands = 1 : i64, tpu.core_type = #tpu.core_type<tc>, window_params = [{transform_indices = @transform_0, window_bounds = array<i64: 8, 32>}, {transform_indices = @transform_1, window_bounds = array<i64: 32, 128>}, {pipeline_mode = #tpu.pipeline_mode<synchronous>, transform_indices = @transform_2, window_bounds = array<i64: 1, 128>}, {transform_indices = @transform_3, window_bounds = array<i64: 8, 128>}]} {
    %c0_i32 = arith.constant 0 : i32
    %0 = arith.cmpi eq, %arg1, %c0_i32 : i32
    %1 = arith.extui %0 : i1 to i32
    %c0_i32_0 = arith.constant 0 : i32
    %2 = arith.cmpi ne, %1, %c0_i32_0 : i32
    scf.if %2 {
      %cst_10 = arith.constant 0.000000e+00 : f32
      %12 = vector.broadcast %cst_10 : f32 to vector<8x128xf32>
      %c0_11 = arith.constant 0 : index
      %c0_12 = arith.constant 0 : index
      %13 = vector.load %arg6[%c0_11, %c0_12] : memref<8x128xf32, #tpu.memory_space<vmem>>, vector<8x128xf32>
      tpu.vector_store %arg6[%c0_11, %c0_12], %12 {strides = array<i32>} : memref<8x128xf32, #tpu.memory_space<vmem>>, vector<8x128xf32>,
    } else {
    }
    %c0 = arith.constant 0 : index
    %c0_1 = arith.constant 0 : index
    %3 = vector.load %arg6[%c0, %c0_1] : memref<8x128xf32, #tpu.memory_space<vmem>>, vector<8x128xf32>
    %c0_2 = arith.constant 0 : index
    %c0_3 = arith.constant 0 : index
    %4 = vector.load %arg2[%c0_2, %c0_3] : memref<8x32xf32, #tpu.memory_space<vmem>>, vector<8x32xf32>
    %c0_4 = arith.constant 0 : index
    %c0_5 = arith.constant 0 : index
    %5 = vector.load %arg3[%c0_4, %c0_5] : memref<32x128xf32, #tpu.memory_space<vmem>>, vector<32x128xf32>
    %cst = arith.constant dense<0.000000e+00> : vector<8x128xf32>
    %6 = tpu.matmul %4, %5, %cst {dimension_numbers = #tpu.dot_dimension_numbers<[1], [0], [0], [1], [0, 0, 1, 1], [], []>} : vector<8x32xf32>, vector<32x128xf32>, vector<8x128xf32> -> vector<8x128xf32>
    %7 = arith.addf %3, %6 : vector<8x128xf32>
    %c0_6 = arith.constant 0 : index
    %c0_7 = arith.constant 0 : index
    %8 = vector.load %arg6[%c0_6, %c0_7] : memref<8x128xf32, #tpu.memory_space<vmem>>, vector<8x128xf32>
    tpu.vector_store %arg6[%c0_6, %c0_7], %7 {strides = array<i32>} : memref<8x128xf32, #tpu.memory_space<vmem>>, vector<8x128xf32>,
    %c0_i32_8 = arith.constant 0 : i32
    %9 = arith.cmpi eq, %arg1, %c0_i32_8 : i32
    %10 = arith.extui %9 : i1 to i32
    %c0_i32_9 = arith.constant 0 : i32
    %11 = arith.cmpi ne, %10, %c0_i32_9 : i32
    scf.if %11 {
      %c0_10 = arith.constant 0 : index
      %c0_11 = arith.constant 0 : index
      %12 = vector.load %arg6[%c0_10, %c0_11] : memref<8x128xf32, #tpu.memory_space<vmem>>, vector<8x128xf32>
      %c0_12 = arith.constant 0 : index
      %c0_13 = arith.constant 0 : index
      %13 = vector.load %arg4[%c0_12, %c0_13] : memref<1x128xf32, #tpu.memory_space<vmem>>, vector<1x128xf32>
      %14 = vector.broadcast %13 : vector<1x128xf32> to vector<8x128xf32>
      %15 = arith.addf %12, %14 : vector<8x128xf32>
      %16 = tpu.iota {dimensions = array<i32: 1>} : vector<8x128xi32>
      %c8_i32 = arith.constant 8 : i32
      %17 = vector.broadcast %c8_i32 : i32 to vector<8x128xi32>
      %18 = arith.cmpi slt, %16, %17 : vector<8x128xi32>
      %c8_i32_14 = arith.constant 8 : i32
      %19 = vector.broadcast %c8_i32_14 : i32 to vector<8x128xi32>
      %20 = arith.cmpi sge, %16, %19 : vector<8x128xi32>
      %c16_i32 = arith.constant 16 : i32
      %21 = vector.broadcast %c16_i32 : i32 to vector<8x128xi32>
      %22 = arith.cmpi slt, %16, %21 : vector<8x128xi32>
      %23 = arith.andi %20, %22 : vector<8x128xi1>
      %c16_i32_15 = arith.constant 16 : i32
      %24 = vector.broadcast %c16_i32_15 : i32 to vector<8x128xi32>
      %25 = arith.cmpi sge, %16, %24 : vector<8x128xi32>
      %c20_i32 = arith.constant 20 : i32
      %26 = vector.broadcast %c20_i32 : i32 to vector<8x128xi32>
      %27 = arith.cmpi slt, %16, %26 : vector<8x128xi32>
      %28 = arith.andi %25, %27 : vector<8x128xi1>
      %29 = math.tanh %15 : vector<8x128xf32>
      %cst_16 = arith.constant -5.000000e+00 : f32
      %cst_17 = arith.constant 3.000000e+00 : f32
      %30 = vector.broadcast %cst_16 : f32 to vector<8x128xf32>
      %31 = arith.maximumf %30, %15 : vector<8x128xf32>
      %32 = vector.broadcast %cst_17 : f32 to vector<8x128xf32>
      %33 = arith.minimumf %32, %31 : vector<8x128xf32>
      %34 = math.exp %33 : vector<8x128xf32>
      %cst_18 = arith.constant 0xFF800000 : f32
      %35 = vector.broadcast %cst_18 : f32 to vector<8x128xf32>
      %36 = arith.select %28, %15, %35 : vector<8x128xi1>, vector<8x128xf32>
      %cst_19 = arith.constant dense<0xFF800000> : vector<8xf32>
      %37 = vector.multi_reduction <maximumf>, %36, %cst_19 [1] : vector<8x128xf32> to vector<8xf32>
      %38 = vector.shape_cast %37 : vector<8xf32> to vector<8x1xf32>
      %39 = vector.broadcast %38 : vector<8x1xf32> to vector<8x128xf32>
      %40 = arith.subf %36, %39 : vector<8x128xf32>
      %41 = math.exp %40 : vector<8x128xf32>
      %cst_20 = arith.constant dense<0.000000e+00> : vector<8xf32>
      %42 = vector.multi_reduction <add>, %41, %cst_20 [1] : vector<8x128xf32> to vector<8xf32>
      %43 = vector.shape_cast %42 : vector<8xf32> to vector<8x1xf32>
      %44 = math.log %43 : vector<8x1xf32>
      %45 = arith.addf %38, %44 : vector<8x1xf32>
      %46 = vector.broadcast %45 : vector<8x1xf32> to vector<8x128xf32>
      %47 = arith.subf %15, %46 : vector<8x128xf32>
      %48 = arith.select %23, %34, %47 : vector<8x128xi1>, vector<8x128xf32>
      %49 = arith.select %18, %29, %48 : vector<8x128xi1>, vector<8x128xf32>
      %c0_21 = arith.constant 0 : index
      %c0_22 = arith.constant 0 : index
      %50 = vector.load %arg5[%c0_21, %c0_22] : memref<8x128xf32, #tpu.memory_space<vmem>>, vector<8x128xf32>
      tpu.vector_store %arg5[%c0_21, %c0_22], %49 {strides = array<i32>} : memref<8x128xf32, #tpu.memory_space<vmem>>, vector<8x128xf32>,
    } else {
    }
    return
  }
  func.func @transform_0(%arg0: i32, %arg1: i32) -> (i32, i32) {
    %c0_i32 = arith.constant 0 : i32
    return %arg0, %arg1 : i32, i32
  }
  func.func @transform_1(%arg0: i32, %arg1: i32) -> (i32, i32) {
    %c0_i32 = arith.constant 0 : i32
    %c0_i32_0 = arith.constant 0 : i32
    return %arg1, %c0_i32 : i32, i32
  }
  func.func @transform_2(%arg0: i32, %arg1: i32) -> (i32, i32) {
    %c0_i32 = arith.constant 0 : i32
    %c0_i32_0 = arith.constant 0 : i32
    %c0_i32_1 = arith.constant 0 : i32
    return %c0_i32, %c0_i32_0 : i32, i32
  }
  func.func @transform_3(%arg0: i32, %arg1: i32) -> (i32, i32) {
    %c0_i32 = arith.constant 0 : i32
    %c0_i32_0 = arith.constant 0 : i32
    return %arg0, %c0_i32 : i32, i32
  }
}

</mosaic_0001>

<llo_original>
// kernel: tpu_custom_call.1
$region0: #{tpu_custom_call.1}
  #allocation0 [shape = 'u32[]', space=smem, size = 0x4, offset = 0x4, fixed_abs, tag = 'smem constant byte address 0x4 - core index']
  #allocation1 [shape = 'u32[72,128]{1,0:T(1,128)}', space=vmem, size = 0x9000, scoped, tag = 'internal scratch']
  #allocation2 [shape = 'f32[8,128]{1,0:T(8,128)}', space=vmem, size = 0x1000, scoped, tag = 'scratch operand']
  %s0 = inlined_call_operand.hbm [shape: f32[16,32], index: 0, kind: input, shape index: {}]
  %s1 = inlined_call_operand.hbm [shape: f32[32,128], index: 1, kind: input, shape index: {}]
  %s2 = inlined_call_operand.vmem [shape: f32[1,128], index: 2, kind: input, shape index: {}]
  %s3 = inlined_call_operand.hbm [shape: f32[16,128], index: 3, kind: output, shape index: {}]
  %s4 = sld [smem:[#allocation0]]
  $region61: #{tpu_custom_call.1} parent=0
    _
  %s6 = ssub.s32 1, %s4
  %s7 = scalar_select 0, %s6, %s4
  $region1: #{tpu_custom_call.1} parent=0
    #allocation3 [shape = 'u8[8192]{0}', space=vmem, size = 0x2000, scoped, tag = 'input window, operand 0']
    #allocation4 [shape = 's32[2]{0}', space=sflag, size = 0x8, scoped, tag = 'scoped memory for tpu_custom_call.1']
    #allocation5 [shape = 's32[2]{0}', space=sflag, size = 0x8, scoped, tag = 'scoped memory for tpu_custom_call.1']
    #allocation6 [shape = 'u8[16384]{0}', space=vmem, size = 0x4000, scoped, tag = 'input window, operand 1, single buffered']
    #allocation7 [shape = 's32[1]{0}', space=sflag, size = 0x4, scoped, tag = 'scoped memory for tpu_custom_call.1']
    #allocation8 [shape = 'u8[8192]{0}', space=vmem, size = 0x2000, scoped, tag = 'output window, operand 0']
    %8 = vsyncpa [#allocation4], 0
    %s9 = scalar_lea.sflag [#allocation4], 1
    %10 = vsyncpa %s9, 0
    %11 = vsyncpa [#allocation7], 0
    %12 = vsyncpa [#allocation5], 0
    %s13 = scalar_lea.sflag [#allocation5], 1
    %14 = vsyncpa %s13, 0
    loop: start=0, step=1, limit=4
    $region2: #{tpu_custom_call.1} parent=1 // loop_pre_header
      _
    $region3: #{tpu_custom_call.1} parent=1 // loop_header
      %s16 = sphi 0, %s20
      %p17 = scmp.ge.s32.totalorder %s16, 4
      %s23 = sphi 0, %s35
      %s24 = sphi 0, %s31
      %s25 = sphi 0, %s23
      %s26 = sphi 0, %s24
      %s27 = sphi 0, %s25
      %s28 = sphi 0, %s26
      %s40 = sphi 0, %s42
      %s43 = sphi 0, %s40
      %s44 = sphi 0, %s43
      %s60 = sphi 0, %s44
      %s66 = sphi 0, %s68
      %s69 = sphi 0, %s66
      %s70 = sphi 0, %s69
      %s86 = sphi 0, %s70
      %s90 = sphi 0, %s90
      %s92 = sphi 0, %s90
      %s93 = sphi 0, %s92
      %s107 = sphi 0, %s93
      %s113 = sphi 0, %s115
      %s116 = sphi 0, %s113
      %s117 = sphi 0, %s116
      %s133 = sphi 0, %s117
    $region4: #{tpu_custom_call.1} parent=1 // loop_header_branch
      %19 = sbr.rel (%p17) target = $region8
    $region5: #{tpu_custom_call.1} parent=1 // loop_body
      %s21 = ssub.s32 %s16, 1
      %s22 = ssub.s32 %s16, 2
      %s29 = sadd.s32 1, %s24
      %p30 = scmp.ge.s32.totalorder %s29, 1
      %s31 = scalar_select %p30, 0, %s29
      %s32 = sadd.s32 1, %s23
      %s33 = scalar_select %p30, %s32, %s23
      %p34 = scmp.ge.s32.totalorder %s33, 2
      %s35 = scalar_select %p34, 0, %s33
      %s36 = ssub.s32 %s23, %s35
      %s37 = ssub.s32 %s24, %s31
      %s38 = sor.u32 %s36, %s37
      %p39 = scmp.eq.s32.totalorder %s38, 0
      %s41 = sadd.s32 %s40, 1
      %s42 = scalar_select %p39, %s40, %s41
      %p45 = pneg %p39
      %p46 = scmp.eq.s32.totalorder %s16, 1
      %p47 = por %p45, %p46
      %p48 = scmp.ne.s32.totalorder %s40, %s43
      %p49 = scmp.eq.s32.totalorder %s16, 0
      %p50 = por %p48, %p49
      %p51 = scmp.ne.s32.totalorder %s40, %s43
      %p52 = scmp.eq.s32.totalorder %s21, 1
      %p53 = por %p51, %p52
      %p54 = scmp.ne.s32.totalorder %s43, %s44
      %p55 = scmp.eq.s32.totalorder %s21, 0
      %p56 = por %p54, %p55
      %p57 = scmp.ne.s32.totalorder %s43, %s44
      %p58 = scmp.eq.s32.totalorder %s22, 1
      %p59 = por %p57, %p58
      %p61 = scmp.ne.s32.totalorder %s44, %s60
      %p62 = scmp.eq.s32.totalorder %s22, 0
      %p63 = por %p61, %p62
      %s64 = ssub.s32 %s24, %s31
      %p65 = scmp.eq.s32.totalorder %s64, 0
      %s67 = sadd.s32 %s66, 1
      %s68 = scalar_select %p65, %s66, %s67
      %p71 = pneg %p65
      %p72 = scmp.eq.s32.totalorder %s16, 1
      %p73 = por %p71, %p72
      %p74 = scmp.ne.s32.totalorder %s66, %s69
      %p75 = scmp.eq.s32.totalorder %s16, 0
      %p76 = por %p74, %p75
      %p77 = scmp.ne.s32.totalorder %s66, %s69
      %p78 = scmp.eq.s32.totalorder %s21, 1
      %p79 = por %p77, %p78
      %p80 = scmp.ne.s32.totalorder %s69, %s70
      %p81 = scmp.eq.s32.totalorder %s21, 0
      %p82 = por %p80, %p81
      %p83 = scmp.ne.s32.totalorder %s69, %s70
      %p84 = scmp.eq.s32.totalorder %s22, 1
      %p85 = por %p83, %p84
      %p87 = scmp.ne.s32.totalorder %s70, %s86
      %p88 = scmp.eq.s32.totalorder %s22, 0
      %p89 = por %p87, %p88
      %s91 = sadd.s32 %s90, 1
      %p94 = scmp.eq.s32.totalorder %s16, 1
      %p95 = scmp.ne.s32.totalorder %s90, %s92
      %p96 = scmp.eq.s32.totalorder %s16, 0
      %p97 = por %p95, %p96
      %p98 = scmp.ne.s32.totalorder %s90, %s92
      %p99 = scmp.eq.s32.totalorder %s21, 1
      %p100 = por %p98, %p99
      %p101 = scmp.ne.s32.totalorder %s92, %s93
      %p102 = scmp.eq.s32.totalorder %s21, 0
      %p103 = por %p101, %p102
      %p104 = scmp.ne.s32.totalorder %s92, %s93
      %p105 = scmp.eq.s32.totalorder %s22, 1
      %p106 = por %p104, %p105
      %p108 = scmp.ne.s32.totalorder %s93, %s107
      %p109 = scmp.eq.s32.totalorder %s22, 0
      %p110 = por %p108, %p109
      %s111 = ssub.s32 %s23, %s35
      %p112 = scmp.eq.s32.totalorder %s111, 0
      %s114 = sadd.s32 %s113, 1
      %s115 = scalar_select %p112, %s113, %s114
      %p118 = pneg %p112
      %p119 = scmp.eq.s32.totalorder %s16, 1
      %p120 = por %p118, %p119
      %p121 = scmp.ne.s32.totalorder %s113, %s116
      %p122 = scmp.eq.s32.totalorder %s16, 0
      %p123 = por %p121, %p122
      %p124 = scmp.ne.s32.totalorder %s113, %s116
      %p125 = scmp.eq.s32.totalorder %s21, 1
      %p126 = por %p124, %p125
      %p127 = scmp.ne.s32.totalorder %s116, %s117
      %p128 = scmp.eq.s32.totalorder %s21, 0
      %p129 = por %p127, %p128
      %p130 = scmp.ne.s32.totalorder %s116, %s117
      %p131 = scmp.eq.s32.totalorder %s22, 1
      %p132 = por %p130, %p131
      %p134 = scmp.ne.s32.totalorder %s117, %s133
      %p135 = scmp.eq.s32.totalorder %s22, 0
      %p136 = por %p134, %p135
      %p137 = scmp.le.s32.totalorder 1, %s16
      %p138 = scmp.lt.s32.totalorder %s16, 3
      %p139 = pnand %p137, %p138
      %p140 = pneg %p139
      // Predicated region
      $region9: #{tpu_custom_call.1} parent=5 // pred_check
        _
      $region10: #{tpu_custom_call.1} parent=5 // pred_check_branch
        %142 = sbr.rel (%p139) target = $region12
      $region11: #{tpu_custom_call.1} parent=5 // pred_region
        %s143 = ssub.s32 %s16, 1
        // Predicated region
        $region13: #{tpu_custom_call.1} parent=11 // pred_check
          %p144 = pneg %p82
        $region14: #{tpu_custom_call.1} parent=11 // pred_check_branch
          %146 = sbr.rel (%p144) target = $region16
        $region15: #{tpu_custom_call.1} parent=11 // pred_region
          %s147 = smul.u32 4, %s26
          %149 = vsyncadd [#allocation7], 0
          %s150 = smul.addr %s147, 8
          %s151 = scalar_lea.hbm %s1, %s150
          %s152 = sshll.u32 %s151, 4
          %s153 = int_to_ptr.hbm [resolvable:$true] %s152
          %s154 = sshll.u32 [#allocation6], 4
          %s155 = int_to_ptr.vmem [resolvable:$true] %s154
          %160 = dma.hbm_to_vmem [thread:$0]  %s153, 512, %s155, [#allocation7], 128, 128, 8
        $region16: #{tpu_custom_call.1} parent=11 // pred_fallthru
          _
        // Predicated region
        $region17: #{tpu_custom_call.1} parent=11 // pred_check
          %p161 = pneg %p103
        $region18: #{tpu_custom_call.1} parent=11 // pred_check_branch
          %163 = sbr.rel (%p161) target = $region20
        $region19: #{tpu_custom_call.1} parent=11 // pred_region
          _
        $region20: #{tpu_custom_call.1} parent=11 // pred_fallthru
          _
      $region12: #{tpu_custom_call.1} parent=5 // pred_fallthru
        _
      %p164 = scmp.lt.s32.totalorder %s16, 2
      // Predicated region
      $region21: #{tpu_custom_call.1} parent=5 // pred_check
        %p165 = pneg %p164
      $region22: #{tpu_custom_call.1} parent=5 // pred_check_branch
        %167 = sbr.rel (%p165) target = $region24
      $region23: #{tpu_custom_call.1} parent=5 // pred_region
        // Predicated region
        $region25: #{tpu_custom_call.1} parent=23 // pred_check
          %p168 = pneg %p50
        $region26: #{tpu_custom_call.1} parent=23 // pred_check_branch
          %170 = sbr.rel (%p168) target = $region28
        $region27: #{tpu_custom_call.1} parent=23 // pred_region
          %s171 = sand.u32 %s40, 1
          %s172 = scalar_lea.sflag [#allocation4], %s171
          %s173 = sand.u32 %s40, 1
          %s174 = smul.addr %s173, 8
          %s175 = scalar_lea.vmem [#allocation3], %s174
          %177 = vsyncadd %s172, 0
          %s178 = sadd.s32 %s24, %s23
          %s179 = smul.addr %s178, 8
          %s180 = scalar_lea.hbm %s0, %s179
          %s182 = sshll.u32 %s180, 4
          %s183 = int_to_ptr.hbm [resolvable:$true] %s182
          %s184 = sshll.u32 %s175, 4
          %s185 = int_to_ptr.vmem [resolvable:$true] %s184
          %187 = dma.hbm_to_vmem [thread:$0]  %s183, 128, %s185, %s172
        $region28: #{tpu_custom_call.1} parent=23 // pred_fallthru
          _
      $region24: #{tpu_custom_call.1} parent=5 // pred_fallthru
        _
      %p188 = scmp.le.s32.totalorder 1, %s16
      %p189 = scmp.lt.s32.totalorder %s16, 3
      %p190 = pnand %p188, %p189
      %p191 = pneg %p190
      // Predicated region
      $region29: #{tpu_custom_call.1} parent=5 // pred_check
        _
      $region30: #{tpu_custom_call.1} parent=5 // pred_check_branch
        %193 = sbr.rel (%p190) target = $region32
      $region31: #{tpu_custom_call.1} parent=5 // pred_region
        %s194 = ssub.s32 %s16, 1
        %s195 = sand.u32 %s43, 1
        %s196 = scalar_lea.sflag [#allocation4], %s195
        %s197 = sand.u32 %s43, 1
        %s198 = smul.addr %s197, 8
        %s199 = scalar_lea.vmem [#allocation3], %s198
        // Predicated region
        $region33: #{tpu_custom_call.1} parent=31 // pred_check
          %p200 = pneg %p56
        $region34: #{tpu_custom_call.1} parent=31 // pred_check_branch
          %202 = sbr.rel (%p200) target = $region36
        $region35: #{tpu_custom_call.1} parent=31 // pred_region
          %204 = dma.done %s196, 128
        $region36: #{tpu_custom_call.1} parent=31 // pred_fallthru
          _
        // Predicated region
        $region37: #{tpu_custom_call.1} parent=31 // pred_check
          %p205 = pneg %p82
        $region38: #{tpu_custom_call.1} parent=31 // pred_check_branch
          %207 = sbr.rel (%p205) target = $region40
        $region39: #{tpu_custom_call.1} parent=31 // pred_region
          %209 = dma.done [#allocation7], 512
        $region40: #{tpu_custom_call.1} parent=31 // pred_fallthru
          _
        %s210 = sand.u32 %s43, 1
        %s211 = scalar_lea.sflag [#allocation4], %s210
        %s212 = sand.u32 %s43, 1
        %s213 = smul.addr %s212, 8
        %s214 = scalar_lea.vmem [#allocation3], %s213
        %p215 = pneg %p56
        %p216 = pneg %p53
        %p217 = pneg %p82
        %p218 = pneg %p79
        %p219 = pneg %p103
        %p220 = pneg %p100
        %p221 = pneg %p129
        %p222 = pneg %p126
        %s223 = sand.u32 %s116, 1
        %s224 = scalar_lea.sflag [#allocation5], %s223
        %s225 = sand.u32 %s116, 1
        %s226 = smul.addr %s225, 8
        %s227 = scalar_lea.vmem [#allocation8], %s226
        %s228 = smul.u32 4, %s26
        %p229 = scmp.eq.s32.totalorder %s26, 0
        // Predicated region
        $region41: #{tpu_custom_call.1} parent=31 // pred_check
          %p230 = pneg %p229
        $region42: #{tpu_custom_call.1} parent=31 // pred_check_branch
          %232 = sbr.rel (%p230) target = $region44
        $region43: #{tpu_custom_call.1} parent=31 // pred_region
          %233 = vst [vmem:[#allocation2] sm:$0xff] 0.0
        $region44: #{tpu_custom_call.1} parent=31 // pred_fallthru
          _
        %v234 = vld [vmem:[#allocation2] sm:$0xff]
        %v235 = vld [vmem:[%s199] sm:$0xff]
        %v236 = vld [vmem:[#allocation6] sm:$0xff]
        %v237 = vld [vmem:[#allocation6 + $0x8] sm:$0xff]
        %v238 = vld [vmem:[#allocation6 + $0x10] sm:$0xff]
        %v239 = vld [vmem:[#allocation6 + $0x18] sm:$0xff]
        %vm240 = vcmask 261120
        %v242 = vsel %vm240, %v235, 0
        %244 = vmatpush.msra.mxu0 0.0
        %245 = vmatpush.msra.mxu0 0.0
        %246 = vmatpush.msra.mxu0 0.0
        %247 = vmatpush.msra.mxu0 0.0
        %248 = vmatpush.msra.mxu0 0.0
        %249 = vmatpush.msra.mxu0 0.0
        %250 = vmatpush.msra.mxu0 0.0
        %251 = vmatpush.msra.mxu0 0.0
        %252 = vmatpush.msra.mxu0 0.0
        %253 = vmatpush.msra.mxu0 0.0
        %254 = vmatpush.msra.mxu0 0.0
        %255 = vmatpush.msra.mxu0 0.0
        %256 = vmatpush.msra.mxu0 %v239
        %257 = vmatpush.msra.mxu0 %v238
        %258 = vmatpush.msra.mxu0 %v237
        %259 = vmatpush.msra.mxu0 %v236
        %260 = vmatmul.f32.gmra.mxu0 %v242
        %v261 = vpop.f32.mrf.mxu0
        %v262 = vadd.f32 0.0, %v261
        %263 = vdwg.mxu0
        %v264 = vadd.f32 %v234, %v262
        %265 = vst [vmem:[#allocation2] sm:$0xff] %v264
        // Predicated region
        $region45: #{tpu_custom_call.1} parent=31 // pred_check
          %p266 = pneg %p229
        $region46: #{tpu_custom_call.1} parent=31 // pred_check_branch
          %268 = sbr.rel (%p266) target = $region48
        $region47: #{tpu_custom_call.1} parent=31 // pred_region
          %v269 = vld [vmem:[#allocation2] sm:$0xff]
          %v270 = vld [vmem:[%s2] sm:$0x1]
          %v272 = vperm.slane %v270, 0
          %v274 = vadd.f32 %v269, %v272
          %v275 = vlaneseq
          %v276 = vand.u32 %v275, 127
          %vm277 = vcmp.lt.s32.totalorder %v276, 8
          %vm278 = vcmp.ge.s32.totalorder %v276, 8
          %vm279 = vcmp.lt.s32.totalorder %v276, 16
          %vm280 = vmand %vm278, %vm279
          %vm281 = vcmp.ge.s32.totalorder %v276, 16
          %vm282 = vcmp.lt.s32.totalorder %v276, 20
          %vm283 = vmand %vm281, %vm282
          %v284 = vtanh.pop %v274
          %v285 = vmax.f32 %v274, -5.0
          %v286 = vmin.f32 %v285, 3.0
          %v287 = vmul.f32 %v286, 1.442695
          %v288 = vpow.pop %v287
          %v289 = vsel %vm283, %v274, -inf
          %290 = vmax.xlane.f32.xlu0 %v289
          %v291 = vpop.xlane.xlu0 %290
          %v292 = vsub.f32 %v289, %v291
          %v293 = vmul.f32 %v292, 1.442695
          %v294 = vpow.pop %v293
          %295 = vadd.xlane.f32.xlu0 %v294
          %v296 = vpop.xlane.xlu0 %295
          %v297 = vlog2.pop %v296
          %v298 = vmul.f32 %v297, 0.6931472
          %v299 = vadd.f32 %v291, %v298
          %v300 = vsub.f32 %v274, %v299
          %v301 = vsel %vm280, %v288, %v300
          %v302 = vsel %vm277, %v284, %v301
          %303 = vst [vmem:[%s227] sm:$0xff] %v302
        $region48: #{tpu_custom_call.1} parent=31 // pred_fallthru
          _
        %s304 = sand.u32 %s116, 1
        %s305 = scalar_lea.sflag [#allocation5], %s304
        %s306 = sand.u32 %s116, 1
        %s307 = smul.addr %s306, 8
        %s308 = scalar_lea.vmem [#allocation8], %s307
        // Predicated region
        $region49: #{tpu_custom_call.1} parent=31 // pred_check
          %p309 = pneg %p126
        $region50: #{tpu_custom_call.1} parent=31 // pred_check_branch
          %311 = sbr.rel (%p309) target = $region52
        $region51: #{tpu_custom_call.1} parent=31 // pred_region
          %313 = vsyncadd %s305, 0
          %s314 = smul.addr %s25, 8
          %s315 = scalar_lea.hbm %s3, %s314
          %s317 = sshll.u32 %s308, 4
          %s318 = int_to_ptr.vmem [resolvable:$true] %s317
          %s319 = sshll.u32 %s315, 4
          %s320 = int_to_ptr.hbm [resolvable:$true] %s319
          %322 = dma.vmem_to_hbm [thread:$0]  %s318, 128, %s320, %s305
        $region52: #{tpu_custom_call.1} parent=31 // pred_fallthru
          _
      $region32: #{tpu_custom_call.1} parent=5 // pred_fallthru
        _
      %p323 = scmp.le.s32.totalorder 2, %s16
      // Predicated region
      $region53: #{tpu_custom_call.1} parent=5 // pred_check
        %p324 = pneg %p323
      $region54: #{tpu_custom_call.1} parent=5 // pred_check_branch
        %326 = sbr.rel (%p324) target = $region56
      $region55: #{tpu_custom_call.1} parent=5 // pred_region
        %s327 = ssub.s32 %s16, 2
        // Predicated region
        $region57: #{tpu_custom_call.1} parent=55 // pred_check
          %p328 = pneg %p132
        $region58: #{tpu_custom_call.1} parent=55 // pred_check_branch
          %330 = sbr.rel (%p328) target = $region60
        $region59: #{tpu_custom_call.1} parent=55 // pred_region
          %s331 = sand.u32 %s117, 1
          %s332 = scalar_lea.sflag [#allocation5], %s331
          %s333 = sand.u32 %s117, 1
          %s334 = smul.addr %s333, 8
          %s335 = scalar_lea.vmem [#allocation8], %s334
          %337 = dma.done %s332, 128
        $region60: #{tpu_custom_call.1} parent=55 // pred_fallthru
          _
      $region56: #{tpu_custom_call.1} parent=5 // pred_fallthru
        _
    $region6: #{tpu_custom_call.1} parent=1 // loop_footer
      %s20 = sadd.s32 1, %s16
    $region7: #{tpu_custom_call.1} parent=1 // loop_footer_branch
      %15 = sbr.rel target = $region3
    $region8: #{tpu_custom_call.1} parent=1 // loop_exit
      _
    %338 = vsyncpa [#allocation4], 1
    %s339 = scalar_lea.sflag [#allocation4], 1
    %340 = vsyncpa %s339, 1
    %341 = vsyncpa [#allocation7], 1
    %342 = vsyncpa [#allocation5], 1
    %s343 = scalar_lea.sflag [#allocation5], 1
    %344 = vsyncpa %s343, 1

</llo_original>
